<compile_context>
chip_gen: v7x
topology: tpu7x:2x2x1
jax: 0.10.0
libtpu: 0.0.40
codegen_flags: <defaults>
</compile_context>

<pallas_src>
import functools

import jax
import jax.numpy as jnp
from jax.experimental import pallas as pl
from jax.experimental.pallas import tpu as pltpu

# vocab_size in the original script comes from the chars of input.txt;
# we pick a deterministic synthetic value (tinyshakespeare-like).
VOCAB_SIZE = 65
_NEG_INF = -1e30  # padding value for the padded vocab columns


def _round_up(x, m):
    return (x + m - 1) // m * m


# ---------------------------------------------------------------------------
# Kernels
# ---------------------------------------------------------------------------

def _logits_kernel(x_ref, table_ref, logits_ref):
    """x_ref: (TILE,1) i32, table_ref: (Vp,Vp) f32, logits_ref: (TILE,Vp) f32."""
    tile = x_ref.shape[0]
    vp = table_ref.shape[1]
    lane = jax.lax.broadcasted_iota(jnp.int32, (tile, vp), 1)
    onehot_x = (lane == x_ref[...]).astype(jnp.float32)
    # Embedding lookup as one-hot @ table (MXU). Kept in f32 for exactness
    # vs. the f32 reference; bf16 operands would be faster on v6e/v7x if the
    # table rounding were acceptable.
    logits_ref[...] = jnp.dot(onehot_x, table_ref[...],
                              preferred_element_type=jnp.float32)


def _fwd_kernel(x_ref, t_ref, table_ref, logits_ref, loss_ref, *, bt_true):
    """Fused embedding lookup + logits writeback + mean cross-entropy."""
    i = pl.program_id(0)
    tile = x_ref.shape[0]
    vp = table_ref.shape[1]

    lane = jax.lax.broadcasted_iota(jnp.int32, (tile, vp), 1)
    onehot_x = (lane == x_ref[...]).astype(jnp.float32)
    logits = jnp.dot(onehot_x, table_ref[...],
                     preferred_element_type=jnp.float32)          # (tile, vp)
    logits_ref[...] = logits

    # Cross entropy; padded lanes hold -1e30 -> exp() == 0, LSE unchanged.
    m = jnp.max(logits, axis=-1, keepdims=True)                   # (tile, 1)
    lse = jnp.log(jnp.sum(jnp.exp(logits - m), axis=-1, keepdims=True)) + m
    picked = jnp.sum(jnp.where(lane == t_ref[...], logits, 0.0),
                     axis=-1, keepdims=True)                      # (tile, 1)

    # Mask rows past the true BT (BT was padded up to a tile multiple).
    row = jax.lax.broadcasted_iota(jnp.int32, (tile, 1), 0)
    valid = (i * tile + row) < bt_true
    per_row = jnp.where(valid, lse - picked, 0.0)
    partial = jnp.sum(per_row, axis=0, keepdims=True)             # (1, 1)

    @pl.when(i == 0)
    def _():
        loss_ref[...] = jnp.zeros_like(loss_ref)

    loss_ref[...] += partial

    @pl.when(i == pl.num_programs(0) - 1)
    def _():
        loss_ref[...] = loss_ref[...] * (1.0 / bt_true)


def _loss_kernel(x_ref, t_ref, table_ref, loss_ref, *, bt_true):
    """Loss-only variant: no (BT, Vp) logits HBM writeback (training path)."""
    i = pl.program_id(0)
    tile = x_ref.shape[0]
    vp = table_ref.shape[1]

    lane = jax.lax.broadcasted_iota(jnp.int32, (tile, vp), 1)
    onehot_x = (lane == x_ref[...]).astype(jnp.float32)
    logits = jnp.dot(onehot_x, table_ref[...],
                     preferred_element_type=jnp.float32)
    m = jnp.max(logits, axis=-1, keepdims=True)
    lse = jnp.log(jnp.sum(jnp.exp(logits - m), axis=-1, keepdims=True)) + m
    picked = jnp.sum(jnp.where(lane == t_ref[...], logits, 0.0),
                     axis=-1, keepdims=True)

    row = jax.lax.broadcasted_iota(jnp.int32, (tile, 1), 0)
    valid = (i * tile + row) < bt_true
    partial = jnp.sum(jnp.where(valid, lse - picked, 0.0),
                      axis=0, keepdims=True)                      # (1, 1)

    @pl.when(i == 0)
    def _():
        loss_ref[...] = jnp.zeros_like(loss_ref)

    loss_ref[...] += partial

    @pl.when(i == pl.num_programs(0) - 1)
    def _():
        loss_ref[...] = loss_ref[...] * (1.0 / bt_true)


# ---------------------------------------------------------------------------
# Wrappers
# ---------------------------------------------------------------------------

def _prep_inputs(x, targets, table, tile_bt):
    B, T = x.shape
    V = table.shape[0]
    Vp = _round_up(V, 128)                       # lane-dense vocab dim
    BT = B * T
    tile = min(_round_up(tile_bt, 8), _round_up(BT, 8))
    BT_pad = _round_up(BT, tile)
    n_tiles = BT_pad // tile

    x_flat = jnp.pad(x.reshape(BT, 1).astype(jnp.int32),
                     ((0, BT_pad - BT), (0, 0)))
    t_flat = None
    if targets is not None:
        t_flat = jnp.pad(targets.reshape(BT, 1).astype(jnp.int32),
                         ((0, BT_pad - BT), (0, 0)))

    # Padded table rows are never selected (token ids < V); padded columns
    # hold -1e30 so they vanish under exp() inside the log-sum-exp.
    table_p = jnp.full((Vp, Vp), _NEG_INF, dtype=jnp.float32)
    table_p = table_p.at[:V, :V].set(table.astype(jnp.float32))

    dims = dict(B=B, T=T, V=V, Vp=Vp, BT=BT, BT_pad=BT_pad,
                tile=tile, n_tiles=n_tiles)
    return x_flat, t_flat, table_p, dims


def bigram_forward(x, targets, embedding_table, *, tile_bt=1024):
    """Pallas equivalent of Bigram.forward.

    x: (B, T) int, targets: (B, T) int or None, embedding_table: (V, V) f32.
    Returns (logits (B, T, V) f32, loss scalar f32 or None).
    """
    x_flat, t_flat, table_p, d = _prep_inputs(x, targets, embedding_table,
                                              tile_bt)
    B, T, V, Vp = d["B"], d["T"], d["V"], d["Vp"]
    BT, BT_pad, tile, n = d["BT"], d["BT_pad"], d["tile"], d["n_tiles"]

    x_spec = pl.BlockSpec((tile, 1), lambda i: (i, 0))
    t_spec = pl.BlockSpec((tile, 1), lambda i: (i, 0))
    tbl_spec = pl.BlockSpec((Vp, Vp), lambda i: (0, 0))
    logit_spec = pl.BlockSpec((tile, Vp), lambda i: (i, 0))
    loss_spec = pl.BlockSpec((1, 1), lambda i: (0, 0))

    if targets is None:
        logits_p = pl.pallas_call(
            _logits_kernel,
            out_shape=jax.ShapeDtypeStruct((BT_pad, Vp), jnp.float32),
            grid_spec=pltpu.PrefetchScalarGridSpec(
                num_scalar_prefetch=0, grid=(n,),
                in_specs=[x_spec, tbl_spec],
                out_specs=logit_spec),
            compiler_params=pltpu.CompilerParams(
                # Independent tiles -> shard across both TCs on v7x.
                dimension_semantics=("parallel",)),
        )(x_flat, table_p)
        return logits_p[:BT, :V].reshape(B, T, V), None

    kernel = functools.partial(_fwd_kernel, bt_true=BT)
    cost = pl.CostEstimate(
        flops=2 * BT_pad * Vp * Vp + 8 * BT_pad * Vp,
        transcendentals=BT_pad * Vp + BT_pad,
        bytes_accessed=BT_pad * Vp * 4 + 2 * BT_pad * 4 + Vp * Vp * 4)
    logits_p, loss = pl.pallas_call(
        kernel,
        out_shape=(jax.ShapeDtypeStruct((BT_pad, Vp), jnp.float32),
                   jax.ShapeDtypeStruct((1, 1), jnp.float32)),
        grid_spec=pltpu.PrefetchScalarGridSpec(
            num_scalar_prefetch=0, grid=(n,),
            in_specs=[x_spec, t_spec, tbl_spec],
            out_specs=(logit_spec, loss_spec)),
        compiler_params=pltpu.CompilerParams(
            # The (1,1) loss block is revisited (accumulated) every step,
            # so this axis must be "arbitrary".
            dimension_semantics=("arbitrary",)),
        cost_estimate=cost,
    )(x_flat, t_flat, table_p)
    return logits_p[:BT, :V].reshape(B, T, V), loss[0, 0]


def bigram_loss(x, targets, embedding_table, *, tile_bt=1024):
    """Training-path mean cross-entropy: skips the logits HBM writeback."""
    x_flat, t_flat, table_p, d = _prep_inputs(x, targets, embedding_table,
                                              tile_bt)
    Vp, BT, tile, n = d["Vp"], d["BT"], d["tile"], d["n_tiles"]

    kernel = functools.partial(_loss_kernel, bt_true=BT)
    loss = pl.pallas_call(
        kernel,
        out_shape=jax.ShapeDtypeStruct((1, 1), jnp.float32),
        grid_spec=pltpu.PrefetchScalarGridSpec(
            num_scalar_prefetch=0, grid=(n,),
            in_specs=[pl.BlockSpec((tile, 1), lambda i: (i, 0)),
                      pl.BlockSpec((tile, 1), lambda i: (i, 0)),
                      pl.BlockSpec((Vp, Vp), lambda i: (0, 0))],
            out_specs=pl.BlockSpec((1, 1), lambda i: (0, 0))),
        compiler_params=pltpu.CompilerParams(
            dimension_semantics=("arbitrary",)),
    )(x_flat, t_flat, table_p)
    return loss[0, 0]


# ---------------------------------------------------------------------------
# Reference + test
# ---------------------------------------------------------------------------

def _reference_forward(x, targets, table):
    logits = table[x]                                   # (B, T, V)
    B, T, V = logits.shape
    src = logits.reshape(B * T, V)
    tgt = targets.reshape(B * T)
    lse = jax.scipy.special.logsumexp(src, axis=-1)
    picked = jnp.take_along_axis(src, tgt[:, None], axis=-1)[:, 0]
    return logits, jnp.mean(lse - picked)


if __name__ == "__main__":
    key = jax.random.PRNGKey(0)
    k_table, k_x, k_t, k_x2, k_t2 = jax.random.split(key, 5)

    V = VOCAB_SIZE
    # nn.Embedding default init: N(0, 1)
    embedding_table = jax.random.normal(k_table, (V, V), dtype=jnp.float32)

    # Small shape consistent with the toy module usage.
    B, T = 2, 8
    x = jax.random.randint(k_x, (B, T), 0, V, dtype=jnp.int32)
    targets = jax.random.randint(k_t, (B, T), 0, V, dtype=jnp.int32)

    logits, loss = bigram_forward(x, targets, embedding_table)
    jax.block_until_ready(logits)
    jax.block_until_ready(loss)

    ref_logits, ref_loss = _reference_forward(x, targets, embedding_table)
    assert logits.shape == (B, T, V)
    assert jnp.allclose(logits, ref_logits, atol=1e-5)
    assert jnp.allclose(loss, ref_loss, atol=1e-5)

    # No-targets path (loss is None), matching the PyTorch module's behavior.
    logits_only, none_loss = bigram_forward(x, None, embedding_table)
    jax.block_until_ready(logits_only)
    assert none_loss is None
    assert jnp.allclose(logits_only, ref_logits, atol=1e-5)

    # Loss-only (training) path: no logits HBM writeback.
    loss_only = bigram_loss(x, targets, embedding_table)
    jax.block_until_ready(loss_only)
    assert jnp.allclose(loss_only, ref_loss, atol=1e-5)

    # Multi-tile + ragged BT (exercises grid pipelining and row masking).
    B2, T2 = 4, 37                       # BT = 148; tile_bt=64 -> 3 tiles
    x2 = jax.random.randint(k_x2, (B2, T2), 0, V, dtype=jnp.int32)
    t2 = jax.random.randint(k_t2, (B2, T2), 0, V, dtype=jnp.int32)
    logits2, loss2 = bigram_forward(x2, t2, embedding_table, tile_bt=64)
    jax.block_until_ready(logits2)
    jax.block_until_ready(loss2)
    ref_logits2, ref_loss2 = _reference_forward(x2, t2, embedding_table)
    assert jnp.allclose(logits2, ref_logits2, atol=1e-5)
    assert jnp.allclose(loss2, ref_loss2, atol=1e-4)

    # TODO(synk): `generate` (autoregressive multinomial sampling loop) is
    # host-side control flow and is not implemented as a kernel.

    print("KERNEL_OK")
</pallas_src>

<mosaic_0001>
module attributes {stable_mosaic.version = 11 : i64} {
  func.func @_fwd_kernel(%arg0: i32, %arg1: memref<16x1xi32, #tpu.memory_space<vmem>>, %arg2: memref<16x1xi32, #tpu.memory_space<vmem>>, %arg3: memref<128x128xf32, #tpu.memory_space<vmem>>, %arg4: memref<16x128xf32, #tpu.memory_space<vmem>>, %arg5: memref<1x1xf32, #tpu.memory_space<vmem>>) attributes {dimension_semantics = [#tpu.dimension_semantics<arbitrary>], iteration_bounds = array<i64: 1>, scalar_prefetch = 0 : i64, scratch_operands = 0 : i64, tpu.core_type = #tpu.core_type<tc>, window_params = [{transform_indices = @transform_0, window_bounds = array<i64: 16, 1>}, {transform_indices = @transform_1, window_bounds = array<i64: 16, 1>}, {pipeline_mode = #tpu.pipeline_mode<synchronous>, transform_indices = @transform_2, window_bounds = array<i64: 128, 128>}, {transform_indices = @transform_3, window_bounds = array<i64: 16, 128>}, {pipeline_mode = #tpu.pipeline_mode<synchronous>, transform_indices = @transform_4, window_bounds = array<i64: 1, 1>}]} {
    %0 = tpu.iota {dimensions = array<i32: 1>} : vector<16x128xi32>
    %c0 = arith.constant 0 : index
    %c0_0 = arith.constant 0 : index
    %1 = vector.load %arg1[%c0, %c0_0] : memref<16x1xi32, #tpu.memory_space<vmem>>, vector<16x1xi32>
    %2 = vector.broadcast %1 : vector<16x1xi32> to vector<16x128xi32>
    %3 = arith.cmpi eq, %0, %2 : vector<16x128xi32>
    %4 = arith.extui %3 : vector<16x128xi1> to vector<16x128xi32>
    %5 = arith.sitofp %4 : vector<16x128xi32> to vector<16x128xf32>
    %c0_1 = arith.constant 0 : index
    %c0_2 = arith.constant 0 : index
    %6 = vector.load %arg3[%c0_1, %c0_2] : memref<128x128xf32, #tpu.memory_space<vmem>>, vector<128x128xf32>
    %cst = arith.constant dense<0.000000e+00> : vector<16x128xf32>
    %7 = tpu.matmul %5, %6, %cst {dimension_numbers = #tpu.dot_dimension_numbers<[1], [0], [0], [1], [0, 0, 1, 1], [], []>} : vector<16x128xf32>, vector<128x128xf32>, vector<16x128xf32> -> vector<16x128xf32>
    %c0_3 = arith.constant 0 : index
    %c0_4 = arith.constant 0 : index
    %8 = vector.load %arg4[%c0_3, %c0_4] : memref<16x128xf32, #tpu.memory_space<vmem>>, vector<16x128xf32>
    tpu.vector_store %arg4[%c0_3, %c0_4], %7 {strides = array<i32>} : memref<16x128xf32, #tpu.memory_space<vmem>>, vector<16x128xf32>,
    %cst_5 = arith.constant dense<0xFF800000> : vector<16xf32>
    %9 = vector.multi_reduction <maximumf>, %7, %cst_5 [1] : vector<16x128xf32> to vector<16xf32>
    %10 = vector.shape_cast %9 : vector<16xf32> to vector<16x1xf32>
    %11 = vector.broadcast %10 : vector<16x1xf32> to vector<16x128xf32>
    %12 = arith.subf %7, %11 : vector<16x128xf32>
    %13 = math.exp %12 : vector<16x128xf32>
    %cst_6 = arith.constant dense<0.000000e+00> : vector<16xf32>
    %14 = vector.multi_reduction <add>, %13, %cst_6 [1] : vector<16x128xf32> to vector<16xf32>
    %15 = vector.shape_cast %14 : vector<16xf32> to vector<16x1xf32>
    %16 = math.log %15 : vector<16x1xf32>
    %17 = arith.addf %16, %10 : vector<16x1xf32>
    %c0_7 = arith.constant 0 : index
    %c0_8 = arith.constant 0 : index
    %18 = vector.load %arg2[%c0_7, %c0_8] : memref<16x1xi32, #tpu.memory_space<vmem>>, vector<16x1xi32>
    %19 = vector.broadcast %18 : vector<16x1xi32> to vector<16x128xi32>
    %20 = arith.cmpi eq, %0, %19 : vector<16x128xi32>
    %cst_9 = arith.constant 0.000000e+00 : f32
    %21 = vector.broadcast %cst_9 : f32 to vector<16x128xf32>
    %22 = arith.select %20, %7, %21 : vector<16x128xi1>, vector<16x128xf32>
    %cst_10 = arith.constant dense<0.000000e+00> : vector<16xf32>
    %23 = vector.multi_reduction <add>, %22, %cst_10 [1] : vector<16x128xf32> to vector<16xf32>
    %24 = vector.shape_cast %23 : vector<16xf32> to vector<16x1xf32>
    %25 = tpu.iota {dimensions = array<i32: 0>} : vector<16x1xi32>
    %c16_i32 = arith.constant 16 : i32
    %26 = arith.muli %arg0, %c16_i32 : i32
    %27 = vector.broadcast %26 : i32 to vector<16x1xi32>
    %28 = arith.addi %27, %25 : vector<16x1xi32>
    %c16_i32_11 = arith.constant 16 : i32
    %29 = vector.broadcast %c16_i32_11 : i32 to vector<16x1xi32>
    %30 = arith.cmpi slt, %28, %29 : vector<16x1xi32>
    %31 = arith.subf %17, %24 : vector<16x1xf32>
    %cst_12 = arith.constant 0.000000e+00 : f32
    %32 = vector.broadcast %cst_12 : f32 to vector<16x1xf32>
    %33 = arith.select %30, %31, %32 : vector<16x1xi1>, vector<16x1xf32>
    %cst_13 = arith.constant dense<0.000000e+00> : vector<1xf32>
    %34 = vector.multi_reduction <add>, %33, %cst_13 [0] : vector<16x1xf32> to vector<1xf32>
    %35 = vector.shape_cast %34 : vector<1xf32> to vector<1x1xf32>
    %c0_i32 = arith.constant 0 : i32
    %36 = arith.cmpi eq, %arg0, %c0_i32 : i32
    %37 = arith.extui %36 : i1 to i32
    %c0_i32_14 = arith.constant 0 : i32
    %38 = arith.cmpi ne, %37, %c0_i32_14 : i32
    scf.if %38 {
      %cst_21 = arith.constant 0.000000e+00 : f32
      %45 = vector.broadcast %cst_21 : f32 to vector<1x1xf32>
      %c0_22 = arith.constant 0 : index
      %c0_23 = arith.constant 0 : index
      %46 = vector.load %arg5[%c0_22, %c0_23] : memref<1x1xf32, #tpu.memory_space<vmem>>, vector<1x1xf32>
      tpu.vector_store %arg5[%c0_22, %c0_23], %45 {strides = array<i32>} : memref<1x1xf32, #tpu.memory_space<vmem>>, vector<1x1xf32>,
    } else {
    }
    %c0_15 = arith.constant 0 : index
    %c0_16 = arith.constant 0 : index
    %39 = vector.load %arg5[%c0_15, %c0_16] : memref<1x1xf32, #tpu.memory_space<vmem>>, vector<1x1xf32>
    %40 = arith.addf %39, %35 : vector<1x1xf32>
    %c0_17 = arith.constant 0 : index
    %c0_18 = arith.constant 0 : index
    %41 = vector.load %arg5[%c0_17, %c0_18] : memref<1x1xf32, #tpu.memory_space<vmem>>, vector<1x1xf32>
    tpu.vector_store %arg5[%c0_17, %c0_18], %40 {strides = array<i32>} : memref<1x1xf32, #tpu.memory_space<vmem>>, vector<1x1xf32>,
    %c0_i32_19 = arith.constant 0 : i32
    %42 = arith.cmpi eq, %arg0, %c0_i32_19 : i32
    %43 = arith.extui %42 : i1 to i32
    %c0_i32_20 = arith.constant 0 : i32
    %44 = arith.cmpi ne, %43, %c0_i32_20 : i32
    scf.if %44 {
      %c0_21 = arith.constant 0 : index
      %c0_22 = arith.constant 0 : index
      %45 = vector.load %arg5[%c0_21, %c0_22] : memref<1x1xf32, #tpu.memory_space<vmem>>, vector<1x1xf32>
      %cst_23 = arith.constant 6.250000e-02 : f32
      %46 = vector.broadcast %cst_23 : f32 to vector<1x1xf32>
      %47 = arith.mulf %45, %46 : vector<1x1xf32>
      %c0_24 = arith.constant 0 : index
      %c0_25 = arith.constant 0 : index
      %48 = vector.load %arg5[%c0_24, %c0_25] : memref<1x1xf32, #tpu.memory_space<vmem>>, vector<1x1xf32>
      tpu.vector_store %arg5[%c0_24, %c0_25], %47 {strides = array<i32>} : memref<1x1xf32, #tpu.memory_space<vmem>>, vector<1x1xf32>,
    } else {
    }
    return
  }
  func.func @transform_0(%arg0: i32) -> (i32, i32) {
    %c0_i32 = arith.constant 0 : i32
    %c0_i32_0 = arith.constant 0 : i32
    return %arg0, %c0_i32 : i32, i32
  }
  func.func @transform_1(%arg0: i32) -> (i32, i32) {
    %c0_i32 = arith.constant 0 : i32
    %c0_i32_0 = arith.constant 0 : i32
    return %arg0, %c0_i32 : i32, i32
  }
  func.func @transform_2(%arg0: i32) -> (i32, i32) {
    %c0_i32 = arith.constant 0 : i32
    %c0_i32_0 = arith.constant 0 : i32
    %c0_i32_1 = arith.constant 0 : i32
    return %c0_i32, %c0_i32_0 : i32, i32
  }
  func.func @transform_3(%arg0: i32) -> (i32, i32) {
    %c0_i32 = arith.constant 0 : i32
    %c0_i32_0 = arith.constant 0 : i32
    return %arg0, %c0_i32 : i32, i32
  }
  func.func @transform_4(%arg0: i32) -> (i32, i32) {
    %c0_i32 = arith.constant 0 : i32
    %c0_i32_0 = arith.constant 0 : i32
    %c0_i32_1 = arith.constant 0 : i32
    return %c0_i32, %c0_i32_0 : i32, i32
  }
}

</mosaic_0001>

<llo_original>
// kernel: tpu_custom_call.1
$region0: #{tpu_custom_call.1}
  #allocation0 [shape = 'u32[]', space=smem, size = 0x4, offset = 0x4, fixed_abs, tag = 'smem constant byte address 0x4 - core index']
  #allocation1 [shape = 'u32[144,128]{1,0:T(1,128)}', space=vmem, size = 0x12000, scoped, tag = 'internal scratch']
  %s0 = inlined_call_operand.vmem [shape: s32[16,1], index: 0, kind: input, shape index: {}]
  %s1 = inlined_call_operand.vmem [shape: s32[16,1], index: 1, kind: input, shape index: {}]
  %s2 = inlined_call_operand.hbm [shape: f32[128,128], index: 2, kind: input, shape index: {}]
  %s3 = inlined_call_operand.hbm [shape: f32[16,128], index: 3, kind: output, shape index: {0}]
  %s4 = inlined_call_operand.hbm [shape: f32[1,1], index: 4, kind: output, shape index: {1}]
  %5 = xla_tuple %s3, %s4
  %s6 = sld [smem:[#allocation0]]
  $region42: #{tpu_custom_call.1} parent=0
    _
  %s8 = ssub.s32 1, %s6
  %s9 = scalar_select 0, %s8, %s6
  $region1: #{tpu_custom_call.1} parent=0
    #allocation2 [shape = 'u8[65536]{0}', space=vmem, size = 0x10000, scoped, tag = 'input window, operand 2, single buffered']
    #allocation3 [shape = 's32[1]{0}', space=sflag, size = 0x4, scoped, tag = 'scoped memory for tpu_custom_call.1']
    #allocation4 [shape = 's32[1]{0}', space=sflag, size = 0x4, scoped, tag = 'scoped memory for tpu_custom_call.1']
    #allocation5 [shape = 'u8[8192]{0}', space=vmem, size = 0x2000, scoped, tag = 'output window, operand 0, single buffered']
    #allocation6 [shape = 'u8[512]{0}', space=vmem, size = 0x400, scoped, tag = 'output window, operand 1, single buffered']
    #allocation7 [shape = 's32[1]{0}', space=sflag, size = 0x4, scoped, tag = 'scoped memory for tpu_custom_call.1']
    %10 = vsyncpa [#allocation3], 0
    %11 = vsyncpa [#allocation4], 0
    %12 = vsyncpa [#allocation7], 0
    // Predicated region
    $region2: #{tpu_custom_call.1} parent=1 // pred_check
      _
    $region3: #{tpu_custom_call.1} parent=1 // pred_check_branch
      %14 = sbr.rel (0) target = $region5
    $region4: #{tpu_custom_call.1} parent=1 // pred_region
      _
    $region5: #{tpu_custom_call.1} parent=1 // pred_fallthru
      _
    // Predicated region
    $region6: #{tpu_custom_call.1} parent=1 // pred_check
      _
    $region7: #{tpu_custom_call.1} parent=1 // pred_check_branch
      %16 = sbr.rel (0) target = $region9
    $region8: #{tpu_custom_call.1} parent=1 // pred_region
      _
    $region9: #{tpu_custom_call.1} parent=1 // pred_fallthru
      _
    // Predicated region
    $region10: #{tpu_custom_call.1} parent=1 // pred_check
      _
    $region11: #{tpu_custom_call.1} parent=1 // pred_check_branch
      %18 = sbr.rel (0) target = $region13
    $region12: #{tpu_custom_call.1} parent=1 // pred_region
      %s20 = ssub.s32 2048, 2048
      %21 = vsyncadd [#allocation3], %s20
      %s22 = sshll.u32 [#allocation2], 4
      %s23 = int_to_ptr.vmem [resolvable:$true] %s22
      %28 = dma.hbm_to_vmem [thread:$0]  %s2, 2048, %s23, [#allocation3], 128, 128, 8
    $region13: #{tpu_custom_call.1} parent=1 // pred_fallthru
      _
    // Predicated region
    $region14: #{tpu_custom_call.1} parent=1 // pred_check
      _
    $region15: #{tpu_custom_call.1} parent=1 // pred_check_branch
      %30 = sbr.rel (0) target = $region17
    $region16: #{tpu_custom_call.1} parent=1 // pred_region
      %31 = dma.done [#allocation3], 2048
    $region17: #{tpu_custom_call.1} parent=1 // pred_fallthru
      _
    %v32 = vlaneseq
    %v33 = vand.u32 %v32, 127
    %v34 = vld [vmem:[%s0] sm:$0xff]
    %v35 = vld [vmem:[%s0 + $0x8] sm:$0xff]
    %36 = vset.pattern.permute.xlu0 0
    %37 = vperm.xlu0 %36, %v34
    %v38 = vpop.permute.xlu0 %37
    %39 = vset.pattern.permute.xlu0 0
    %40 = vperm.xlu0 %39, %v35
    %v41 = vpop.permute.xlu0 %40
    %vm42 = vcmp.eq.s32.totalorder %v33, %v38
    %vm43 = vcmp.eq.s32.totalorder %v33, %v41
    %v44 = vsel %vm42, 1, 0
    %v45 = vsel %vm43, 1, 0
    %v46 = vcvt.s32.f32 %v44
    %v47 = vcvt.s32.f32 %v45
    %v48 = vld [vmem:[#allocation2] sm:$0xff]
    %v49 = vld [vmem:[#allocation2 + $0x8] sm:$0xff]
    %v50 = vld [vmem:[#allocation2 + $0x10] sm:$0xff]
    %v51 = vld [vmem:[#allocation2 + $0x18] sm:$0xff]
    %v52 = vld [vmem:[#allocation2 + $0x20] sm:$0xff]
    %v53 = vld [vmem:[#allocation2 + $0x28] sm:$0xff]
    %v54 = vld [vmem:[#allocation2 + $0x30] sm:$0xff]
    %v55 = vld [vmem:[#allocation2 + $0x38] sm:$0xff]
    %v56 = vld [vmem:[#allocation2 + $0x40] sm:$0xff]
    %v57 = vld [vmem:[#allocation2 + $0x48] sm:$0xff]
    %v58 = vld [vmem:[#allocation2 + $0x50] sm:$0xff]
    %v59 = vld [vmem:[#allocation2 + $0x58] sm:$0xff]
    %v60 = vld [vmem:[#allocation2 + $0x60] sm:$0xff]
    %v61 = vld [vmem:[#allocation2 + $0x68] sm:$0xff]
    %v62 = vld [vmem:[#allocation2 + $0x70] sm:$0xff]
    %v63 = vld [vmem:[#allocation2 + $0x78] sm:$0xff]
    %64 = vmatprep.subr.mxu0 0.0
    %65 = vmatpush1.msra.mxu0 %v48
    %66 = vmatprep.subr.mxu0 0.0
    %67 = vmatpush1.msra.mxu0 %v49
    %68 = vmatprep.subr.mxu0 0.0
    %69 = vmatpush1.msra.mxu0 %v50
    %70 = vmatprep.subr.mxu0 0.0
    %71 = vmatpush1.msra.mxu0 %v51
    %72 = vmatprep.subr.mxu0 0.0
    %73 = vmatpush1.msra.mxu0 %v52
    %74 = vmatprep.subr.mxu0 0.0
    %75 = vmatpush1.msra.mxu0 %v53
    %76 = vmatprep.subr.mxu0 0.0
    %77 = vmatpush1.msra.mxu0 %v54
    %78 = vmatprep.subr.mxu0 0.0
    %79 = vmatpush1.msra.mxu0 %v55
    %80 = vmatprep.subr.mxu0 0.0
    %81 = vmatpush1.msra.mxu0 %v56
    %82 = vmatprep.subr.mxu0 0.0
    %83 = vmatpush1.msra.mxu0 %v57
    %84 = vmatprep.subr.mxu0 0.0
    %85 = vmatpush1.msra.mxu0 %v58
    %86 = vmatprep.subr.mxu0 0.0
    %87 = vmatpush1.msra.mxu0 %v59
    %88 = vmatprep.subr.mxu0 0.0
    %89 = vmatpush1.msra.mxu0 %v60
    %90 = vmatprep.subr.mxu0 0.0
    %91 = vmatpush1.msra.mxu0 %v61
    %92 = vmatprep.subr.mxu0 0.0
    %93 = vmatpush1.msra.mxu0 %v62
    %94 = vmatprep.subr.mxu0 0.0
    %95 = vmatpush1.msra.mxu0 %v63
    %96 = vmatprep.subr.mxu0 0.0
    %97 = vmatpush1.msra.mxu0 0.0
    %98 = vmatprep.subr.mxu0 0.0
    %99 = vmatpush1.msra.mxu0 0.0
    %100 = vmatprep.subr.mxu0 0.0
    %101 = vmatpush1.msra.mxu0 0.0
    %102 = vmatprep.subr.mxu0 0.0
    %103 = vmatpush1.msra.mxu0 0.0
    %104 = vmatprep.subr.mxu0 0.0
    %105 = vmatpush1.msra.mxu0 0.0
    %106 = vmatprep.subr.mxu0 0.0
    %107 = vmatpush1.msra.mxu0 0.0
    %108 = vmatprep.subr.mxu0 0.0
    %109 = vmatpush1.msra.mxu0 0.0
    %110 = vmatprep.subr.mxu0 0.0
    %111 = vmatpush1.msra.mxu0 0.0
    %112 = vmatprep.subr.mxu0 0.0
    %113 = vmatpush1.msra.mxu0 0.0
    %114 = vmatprep.subr.mxu0 0.0
    %115 = vmatpush1.msra.mxu0 0.0
    %116 = vmatprep.subr.mxu0 0.0
    %117 = vmatpush1.msra.mxu0 0.0
    %118 = vmatprep.subr.mxu0 0.0
    %119 = vmatpush1.msra.mxu0 0.0
    %120 = vmatprep.subr.mxu0 0.0
    %121 = vmatpush1.msra.mxu0 0.0
    %122 = vmatprep.subr.mxu0 0.0
    %123 = vmatpush1.msra.mxu0 0.0
    %124 = vmatprep.subr.mxu0 0.0
    %125 = vmatpush1.msra.mxu0 0.0
    %126 = vmatprep.subr.mxu0 0.0
    %127 = vmatpush1.msra.mxu0 0.0
    %128 = vmatprep.mubr.f32.mxu0 0.0
    %129 = vmatmul.mubr.f32.gmra.mrb[0].mxu0 %v46
    %v130 = vpop.f32.mrb[0].mxu0
    %v131 = vadd.f32 0.0, %v130
    %v132 = vpop.f32.mrb[0].mxu0
    %133 = vmatprep.mubr.f32.mxu0 0.0
    %134 = vmatmul.mubr.f32.gmra.mrb[0].mxu0 %v47
    %v135 = vpop.f32.mrb[0].mxu0
    %v136 = vadd.f32 0.0, %v135
    %v137 = vpop.f32.mrb[0].mxu0
    %138 = vdwg.mxu0
    %139 = vst [vmem:[#allocation5] sm:$0xff] %v131
    %140 = vst [vmem:[#allocation5 + $0x8] sm:$0xff] %v136
    %141 = vmax.xlane.f32.xlu0 %v131
    %v142 = vpop.xlane.xlu0 %141
    %143 = vmax.xlane.f32.xlu0 %v136
    %v144 = vpop.xlane.xlu0 %143
    %v145 = vsub.f32 %v131, %v142
    %v146 = vsub.f32 %v136, %v144
    %v147 = vmul.f32 %v145, 1.442695
    %v148 = vpow.pop %v147
    %v149 = vmul.f32 %v146, 1.442695
    %v150 = vpow.pop %v149
    %151 = vadd.xlane.f32.xlu0 %v148
    %v152 = vpop.xlane.xlu0 %151
    %153 = vadd.xlane.f32.xlu0 %v150
    %v154 = vpop.xlane.xlu0 %153
    %v155 = vlog2.pop %v152
    %v156 = vmul.f32 %v155, 0.6931472
    %v157 = vlog2.pop %v154
    %v158 = vmul.f32 %v157, 0.6931472
    %v159 = vadd.f32 %v156, %v142
    %v160 = vadd.f32 %v158, %v144
    %v161 = vld [vmem:[%s1] sm:$0xff]
    %v162 = vld [vmem:[%s1 + $0x8] sm:$0xff]
    %163 = vset.pattern.permute.xlu0 0
    %164 = vperm.xlu0 %163, %v161
    %v165 = vpop.permute.xlu0 %164
    %166 = vset.pattern.permute.xlu0 0
    %167 = vperm.xlu0 %166, %v162
    %v168 = vpop.permute.xlu0 %167
    %vm169 = vcmp.eq.s32.totalorder %v33, %v165
    %vm170 = vcmp.eq.s32.totalorder %v33, %v168
    %v171 = vsel %vm169, %v131, 0.0
    %v172 = vsel %vm170, %v136, 0.0
    %173 = vadd.xlane.f32.xlu0 %v171
    %v174 = vpop.xlane.xlu0 %173
    %175 = vadd.xlane.f32.xlu0 %v172
    %v176 = vpop.xlane.xlu0 %175
    %v177 = vlaneseq
    %v178 = vshrl.u32 %v177, 7
    %v179 = vadd.s32 %v178, 8
    %s180 = smul.u32 0, 16
    %v181 = vstv %s180
    %v182 = vadd.s32 %v181, %v178
    %v183 = vadd.s32 %v181, %v179
    %vm184 = vcmp.lt.s32.totalorder %v182, 16
    %vm185 = vcmp.lt.s32.totalorder %v183, 16
    %v186 = vsub.f32 %v159, %v174
    %v187 = vsub.f32 %v160, %v176
    %v188 = vsel %vm184, %v186, 0.0
    %v189 = vsel %vm185, %v187, 0.0
    %v190 = vadd.f32 %v188, %v189
    %v191 = vrot.slane %v190, 4
    %v192 = vadd.f32 %v190, %v191
    %v193 = vrot.slane %v192, 2
    %v194 = vadd.f32 %v192, %v193
    %v195 = vrot.slane %v194, 1
    %v196 = vadd.f32 %v194, %v195
    %p197 = scmp.eq.s32.totalorder 0, 0
    // Predicated region
    $region18: #{tpu_custom_call.1} parent=1 // pred_check
      %p198 = pneg %p197
    $region19: #{tpu_custom_call.1} parent=1 // pred_check_branch
      %200 = sbr.rel (%p198) target = $region21
    $region20: #{tpu_custom_call.1} parent=1 // pred_region
      %vm201 = vcmask 0
      %202 = vst.msk [vmem:[#allocation6] sm:$0x1] %vm201, 0.0
    $region21: #{tpu_custom_call.1} parent=1 // pred_fallthru
      _
    %v203 = vld [vmem:[#allocation6] sm:$0x1]
    %v204 = vadd.f32 %v203, %v196
    %vm205 = vcmask 0
    %206 = vst.msk [vmem:[#allocation6] sm:$0x1] %vm205, %v204
    // Predicated region
    $region22: #{tpu_custom_call.1} parent=1 // pred_check
      %p207 = pneg %p197
    $region23: #{tpu_custom_call.1} parent=1 // pred_check_branch
      %209 = sbr.rel (%p207) target = $region25
    $region24: #{tpu_custom_call.1} parent=1 // pred_region
      %v210 = vld [vmem:[#allocation6] sm:$0x1]
      %v211 = vmul.f32 %v210, 0.0625
      %212 = vst.msk [vmem:[#allocation6] sm:$0x1] %vm205, %v211
    $region25: #{tpu_custom_call.1} parent=1 // pred_fallthru
      _
    // Predicated region
    $region26: #{tpu_custom_call.1} parent=1 // pred_check
      _
    $region27: #{tpu_custom_call.1} parent=1 // pred_check_branch
      %214 = sbr.rel (0) target = $region29
    $region28: #{tpu_custom_call.1} parent=1 // pred_region
      %s216 = ssub.s32 256, 256
      %217 = vsyncadd [#allocation4], %s216
      %s218 = sshll.u32 [#allocation5], 4
      %s219 = int_to_ptr.vmem [resolvable:$true] %s218
      %224 = dma.vmem_to_hbm [thread:$0]  %s219, 256, %s3, [#allocation4], 128, 128, 8
    $region29: #{tpu_custom_call.1} parent=1 // pred_fallthru
      _
    // Predicated region
    $region30: #{tpu_custom_call.1} parent=1 // pred_check
      _
    $region31: #{tpu_custom_call.1} parent=1 // pred_check_branch
      %226 = sbr.rel (0) target = $region33
    $region32: #{tpu_custom_call.1} parent=1 // pred_region
      %s228 = ssub.s32 16, 16
      %229 = vsyncadd [#allocation7], %s228
      %s231 = sshll.u32 [#allocation6], 4
      %s232 = int_to_ptr.vmem [resolvable:$true] %s231
      %234 = dma.vmem_to_hbm [thread:$0]  %s232, 16, %s4, [#allocation7]
    $region33: #{tpu_custom_call.1} parent=1 // pred_fallthru
      _
    // Predicated region
    $region34: #{tpu_custom_call.1} parent=1 // pred_check
      _
    $region35: #{tpu_custom_call.1} parent=1 // pred_check_branch
      %236 = sbr.rel (0) target = $region37
    $region36: #{tpu_custom_call.1} parent=1 // pred_region
      %237 = dma.done [#allocation4], 256
    $region37: #{tpu_custom_call.1} parent=1 // pred_fallthru
      _
    // Predicated region
    $region38: #{tpu_custom_call.1} parent=1 // pred_check
      _
    $region39: #{tpu_custom_call.1} parent=1 // pred_check_branch
      %239 = sbr.rel (0) target = $region41
    $region40: #{tpu_custom_call.1} parent=1 // pred_region
      %240 = dma.done [#allocation7], 16
    $region41: #{tpu_custom_call.1} parent=1 // pred_fallthru
      _
    %241 = vsyncpa [#allocation3], 1
    %242 = vsyncpa [#allocation4], 1
    %243 = vsyncpa [#allocation7], 1

</llo_original>
